<compile_context>
chip_gen: v7x
topology: tpu7x:2x2x1
jax: 0.10.0
libtpu: 0.0.40
codegen_flags: <defaults>
</compile_context>

<pallas_src>
import functools
import math

import jax
import jax.numpy as jnp
from jax.experimental import pallas as pl
from jax.experimental.pallas import tpu as pltpu

_INV_SQRT2 = 1.0 / math.sqrt(2.0)
_SQRT_2_OVER_PI = math.sqrt(2.0 / math.pi)


def _round_up(a: int, b: int) -> int:
    return ((a + b - 1) // b) * b


def _gelu_f32(h, approx: bool):
    if approx:
        # tanh-approximation GELU: tanh lowers to the EUP (a separate VLIW
        # slot), freeing the VALU that a full erf polynomial would occupy.
        return 0.5 * h * (1.0 + jnp.tanh(_SQRT_2_OVER_PI * (h + 0.044715 * h * h * h)))
    # erf-based GELU (bit-matches the HuggingFace / torch.erf reference).
    return h * 0.5 * (1.0 + jax.lax.erf(h * _INV_SQRT2))


# ---------------------------------------------------------------------------
# Kernels
# ---------------------------------------------------------------------------

def _ffn_kernel_acc(x_ref, w1_ref, b1_ref, w2_ref, b2_ref, o_ref, acc_ref, *,
                    approx_gelu: bool):
    """Multi ff-tile path: accumulate fc2 partials over the dim_ff grid axis."""
    j = pl.program_id(1)

    @pl.when(j == 0)
    def _init():
        acc_ref[...] = jnp.zeros_like(acc_ref)

    # fc1 partial: (tm, dim) @ (dim, tf) with f32 accumulation on the MXU.
    h = jnp.dot(x_ref[...], w1_ref[...], preferred_element_type=jnp.float32)
    h = h + b1_ref[...].astype(jnp.float32)
    h = _gelu_f32(h, approx_gelu)

    # fc2 partial: (tm, tf) @ (tf, dim), accumulated in f32 VMEM scratch.
    acc_ref[...] += jnp.dot(h.astype(w2_ref.dtype), w2_ref[...],
                            preferred_element_type=jnp.float32)

    @pl.when(j == pl.num_programs(1) - 1)
    def _finalize():
        o_ref[...] = (acc_ref[...] + b2_ref[...].astype(jnp.float32)).astype(o_ref.dtype)


def _ffn_kernel_single(x_ref, w1_ref, b1_ref, w2_ref, b2_ref, o_ref, *,
                       approx_gelu: bool):
    """Single ff-tile path: no scratch accumulator, straight to o_ref."""
    h = jnp.dot(x_ref[...], w1_ref[...], preferred_element_type=jnp.float32)
    h = h + b1_ref[...].astype(jnp.float32)
    h = _gelu_f32(h, approx_gelu)
    out = jnp.dot(h.astype(w2_ref.dtype), w2_ref[...],
                  preferred_element_type=jnp.float32)
    o_ref[...] = (out + b2_ref[...].astype(jnp.float32)).astype(o_ref.dtype)


# ---------------------------------------------------------------------------
# Tile selection
# ---------------------------------------------------------------------------

def _vmem_bytes(tm: int, tf: int, dim: int, x_item: int, w_item: int) -> int:
    """Estimated VMEM working set for one grid step (double-buffered tiles)."""
    dbl = 2
    tiles = dbl * (tm * dim * x_item       # x tile
                   + dim * tf * w_item     # w1 tile
                   + tf * w_item           # b1 row
                   + tf * dim * w_item     # w2 tile
                   + dim * w_item          # b2 row
                   + tm * dim * x_item)    # out tile
    acc = tm * dim * 4                     # f32 accumulator scratch
    internal = tm * tf * (4 + w_item)      # f32 h temp + its cast for fc2
    return tiles + acc + internal


def _pick_tm(M: int, tm_req: int) -> int:
    tm_req = max(8, _round_up(min(tm_req, 1024), 8))
    if M <= tm_req:
        tm = _round_up(M, 8)
        # v7x megacore: keep >=2 steps on the 'parallel' row axis when a
        # single tile would be large, so both TensorCores get work.
        if tm > 256:
            tm = max(128, _round_up(-(-M // 2), 8))
        return tm
    # M > tm_req: pick the multiple-of-8 tile <= tm_req minimizing row padding.
    best_tm = tm_req
    best_pad = _round_up(M, best_tm) - M
    cand = tm_req - 8
    lo = max(128, tm_req // 2)
    while cand >= lo and best_pad > 0:
        pad = _round_up(M, cand) - M
        if pad < best_pad:
            best_tm, best_pad = cand, pad
        cand -= 8
    return best_tm


def _pick_tf(dim_ff: int, tf_req: int) -> int:
    if dim_ff <= tf_req:
        return dim_ff
    tf_req = max(128, (tf_req // 128) * 128)
    lo = max(128, tf_req // 2)
    # Prefer an exact divisor of dim_ff (no per-call weight padding).
    cand = tf_req
    while cand >= lo:
        if dim_ff % cand == 0:
            return cand
        cand -= 128
    # Fall back: multiple of 128 with the least column padding.
    best_tf, best_pad = tf_req, _round_up(dim_ff, tf_req) - dim_ff
    cand = tf_req - 128
    while cand >= lo:
        pad = _round_up(dim_ff, cand) - dim_ff
        if pad < best_pad:
            best_tf, best_pad = cand, pad
        cand -= 128
    return best_tf


def _fit_tiles(M, dim, dim_ff, x_item, w_item, tm_req, tf_req, budget):
    tm = _pick_tm(M, tm_req)
    tf = _pick_tf(dim_ff, tf_req)
    # Shrink to fit the VMEM budget (tf first, then tm).
    while _vmem_bytes(tm, tf, dim, x_item, w_item) > budget:
        if tf > 512:
            tf = max(512, ((tf // 2) // 128) * 128)
        elif tm > 128:
            tm = max(128, _round_up(tm // 2, 8))
        elif tf > 128:
            tf = max(128, ((tf // 2) // 128) * 128)
        else:
            break
    return tm, tf


# ---------------------------------------------------------------------------
# Wrapper
# ---------------------------------------------------------------------------

def position_wise_feed_forward(x, w1, b1, w2, b2, *,
                               tm=512, tf=2048,
                               compute_dtype=None,
                               approx_gelu=False,
                               vmem_budget_bytes=40 * 1024 * 1024):
    """x: (B, S, dim); w1: (dim, dim_ff); b1: (dim_ff,); w2: (dim_ff, dim); b2: (dim,).

    compute_dtype=jnp.bfloat16 enables the 2x MXU-rate path (f32 accumulation
    retained; output is cast back to x.dtype).  approx_gelu=True uses the
    tanh-approximation GELU (EUP-routed) instead of the exact erf form.
    """
    B, S, dim = x.shape
    dim_ff = w1.shape[1]
    M = B * S
    out_dtype = x.dtype

    if compute_dtype is not None:
        x = x.astype(compute_dtype)
        w1 = w1.astype(compute_dtype)
        w2 = w2.astype(compute_dtype)

    x_item = jnp.dtype(x.dtype).itemsize
    w_item = jnp.dtype(w1.dtype).itemsize

    tm, tf = _fit_tiles(M, dim, dim_ff, x_item, w_item, tm, tf, vmem_budget_bytes)

    M_pad = _round_up(M, tm)
    ff_pad = _round_up(dim_ff, tf)
    grid_m = M_pad // tm
    grid_f = ff_pad // tf

    x2d = x.reshape(M, dim)
    if M_pad != M:
        x2d = jnp.pad(x2d, ((0, M_pad - M), (0, 0)))
    if ff_pad != dim_ff:
        # Zero-padded ff columns of w1 / rows of w2 contribute exactly zero.
        w1 = jnp.pad(w1, ((0, 0), (0, ff_pad - dim_ff)))
        b1 = jnp.pad(b1, ((0, ff_pad - dim_ff),))
        w2 = jnp.pad(w2, ((0, ff_pad - dim_ff), (0, 0)))

    b1_2d = b1.reshape(1, ff_pad)
    b2_2d = b2.reshape(1, dim)

    # Advisory cost: weights are re-streamed once per row tile (grid_m passes).
    cost = pl.CostEstimate(
        flops=4 * M_pad * dim * ff_pad,
        transcendentals=M_pad * ff_pad,
        bytes_accessed=(2 * M_pad * dim * x_item
                        + grid_m * 2 * dim * ff_pad * w_item
                        + (ff_pad + dim) * w_item),
    )

    vmem_limit = min(48 * 1024 * 1024,
                     max(16 * 1024 * 1024,
                         int(_vmem_bytes(tm, tf, dim, x_item, w_item) * 1.3)))

    if grid_f == 1:
        kernel = functools.partial(_ffn_kernel_single, approx_gelu=approx_gelu)
        grid_spec = pltpu.PrefetchScalarGridSpec(
            num_scalar_prefetch=0,
            grid=(grid_m,),
            in_specs=[
                pl.BlockSpec((tm, dim), lambda i: (i, 0)),    # x row tile
                pl.BlockSpec((dim, tf), lambda i: (0, 0)),    # full w1
                pl.BlockSpec((1, tf), lambda i: (0, 0)),      # b1
                pl.BlockSpec((tf, dim), lambda i: (0, 0)),    # full w2
                pl.BlockSpec((1, dim), lambda i: (0, 0)),     # b2
            ],
            out_specs=pl.BlockSpec((tm, dim), lambda i: (i, 0)),
        )
        dim_sem = ("parallel",)
    else:
        kernel = functools.partial(_ffn_kernel_acc, approx_gelu=approx_gelu)
        grid_spec = pltpu.PrefetchScalarGridSpec(
            num_scalar_prefetch=0,
            grid=(grid_m, grid_f),
            in_specs=[
                pl.BlockSpec((tm, dim), lambda i, j: (i, 0)),   # x row tile
                pl.BlockSpec((dim, tf), lambda i, j: (0, j)),   # w1 ff-tile
                pl.BlockSpec((1, tf), lambda i, j: (0, j)),     # b1 ff-tile
                pl.BlockSpec((tf, dim), lambda i, j: (j, 0)),   # w2 ff-tile
                pl.BlockSpec((1, dim), lambda i, j: (0, 0)),    # b2
            ],
            out_specs=pl.BlockSpec((tm, dim), lambda i, j: (i, 0)),
            scratch_shapes=[pltpu.VMEM((tm, dim), jnp.float32)],  # f32 accumulator
        )
        dim_sem = ("parallel", "arbitrary")

    out2d = pl.pallas_call(
        kernel,
        out_shape=jax.ShapeDtypeStruct((M_pad, dim), out_dtype),
        grid_spec=grid_spec,
        compiler_params=pltpu.CompilerParams(
            dimension_semantics=dim_sem,
            vmem_limit_bytes=vmem_limit,
        ),
        cost_estimate=cost,
    )(x2d, w1, b1_2d, w2, b2_2d)

    return out2d[:M].reshape(B, S, dim)


def _reference(x, w1, b1, w2, b2):
    h = jnp.einsum("bsd,df->bsf", x, w1) + b1
    h = h * 0.5 * (1.0 + jax.lax.erf(h / jnp.sqrt(2.0)))
    return jnp.einsum("bsf,fd->bsd", h, w2) + b2


if __name__ == "__main__":
    # Small shapes consistent with the module: batch=2, seq=8, dim=32, dim_ff=64.
    B, S, dim, dim_ff = 2, 8, 32, 64

    key = jax.random.PRNGKey(0)
    kx, k1, kb1, k2, kb2 = jax.random.split(key, 5)

    x = jax.random.normal(kx, (B, S, dim), dtype=jnp.float32)

    # nn.Linear(dim, dim_ff): torch weight (dim_ff, dim) -> stored transposed (dim, dim_ff)
    bound1 = 1.0 / math.sqrt(dim)
    w1 = jax.random.uniform(k1, (dim, dim_ff), minval=-bound1, maxval=bound1,
                            dtype=jnp.float32)
    b1 = jax.random.uniform(kb1, (dim_ff,), minval=-bound1, maxval=bound1,
                            dtype=jnp.float32)

    # nn.Linear(dim_ff, dim): torch weight (dim, dim_ff) -> stored transposed (dim_ff, dim)
    bound2 = 1.0 / math.sqrt(dim_ff)
    w2 = jax.random.uniform(k2, (dim_ff, dim), minval=-bound2, maxval=bound2,
                            dtype=jnp.float32)
    b2 = jax.random.uniform(kb2, (dim,), minval=-bound2, maxval=bound2,
                            dtype=jnp.float32)

    out = position_wise_feed_forward(x, w1, b1, w2, b2)
    out = jax.block_until_ready(out)

    ref = _reference(x, w1, b1, w2, b2)
    assert out.shape == (B, S, dim)
    assert jnp.allclose(out, ref, atol=1e-5, rtol=1e-5), "mismatch vs reference"

    # Exercise the multi-ff-tile (accumulator) path as well with forced tiny tiles.
    out2 = position_wise_feed_forward(x, w1, b1, w2, b2, tm=8, tf=128)
    out2 = jax.block_until_ready(out2)
    assert jnp.allclose(out2, ref, atol=1e-5, rtol=1e-5), "mismatch vs reference (tiled path)"

    print("KERNEL_OK")
</pallas_src>

<mosaic_0001>
module attributes {stable_mosaic.version = 11 : i64} {
  func.func @_ffn_kernel_single(%arg0: i32, %arg1: memref<16x32xf32, #tpu.memory_space<vmem>>, %arg2: memref<32x64xf32, #tpu.memory_space<vmem>>, %arg3: memref<1x64xf32, #tpu.memory_space<vmem>>, %arg4: memref<64x32xf32, #tpu.memory_space<vmem>>, %arg5: memref<1x32xf32, #tpu.memory_space<vmem>>, %arg6: memref<16x32xf32, #tpu.memory_space<vmem>>) attributes {dimension_semantics = [#tpu.dimension_semantics<parallel>], iteration_bounds = array<i64: 1>, scalar_prefetch = 0 : i64, scratch_operands = 0 : i64, tpu.core_type = #tpu.core_type<tc>, window_params = [{transform_indices = @transform_0, window_bounds = array<i64: 16, 32>}, {pipeline_mode = #tpu.pipeline_mode<synchronous>, transform_indices = @transform_1, window_bounds = array<i64: 32, 64>}, {pipeline_mode = #tpu.pipeline_mode<synchronous>, transform_indices = @transform_2, window_bounds = array<i64: 1, 64>}, {pipeline_mode = #tpu.pipeline_mode<synchronous>, transform_indices = @transform_3, window_bounds = array<i64: 64, 32>}, {pipeline_mode = #tpu.pipeline_mode<synchronous>, transform_indices = @transform_4, window_bounds = array<i64: 1, 32>}, {transform_indices = @transform_5, window_bounds = array<i64: 16, 32>}]} {
    %c0 = arith.constant 0 : index
    %c0_0 = arith.constant 0 : index
    %0 = vector.load %arg1[%c0, %c0_0] : memref<16x32xf32, #tpu.memory_space<vmem>>, vector<16x32xf32>
    %c0_1 = arith.constant 0 : index
    %c0_2 = arith.constant 0 : index
    %1 = vector.load %arg2[%c0_1, %c0_2] : memref<32x64xf32, #tpu.memory_space<vmem>>, vector<32x64xf32>
    %cst = arith.constant dense<0.000000e+00> : vector<16x64xf32>
    %2 = tpu.matmul %0, %1, %cst {dimension_numbers = #tpu.dot_dimension_numbers<[1], [0], [0], [1], [0, 0, 1, 1], [], []>} : vector<16x32xf32>, vector<32x64xf32>, vector<16x64xf32> -> vector<16x64xf32>
    %c0_3 = arith.constant 0 : index
    %c0_4 = arith.constant 0 : index
    %3 = vector.load %arg3[%c0_3, %c0_4] : memref<1x64xf32, #tpu.memory_space<vmem>>, vector<1x64xf32>
    %4 = vector.broadcast %3 : vector<1x64xf32> to vector<16x64xf32>
    %5 = arith.addf %2, %4 : vector<16x64xf32>
    %cst_5 = arith.constant 5.000000e-01 : f32
    %6 = vector.broadcast %cst_5 : f32 to vector<16x64xf32>
    %7 = arith.mulf %5, %6 : vector<16x64xf32>
    %cst_6 = arith.constant 0.707106769 : f32
    %8 = vector.broadcast %cst_6 : f32 to vector<16x64xf32>
    %9 = arith.mulf %5, %8 : vector<16x64xf32>
    %10 = math.erf %9 : vector<16x64xf32>
    %cst_7 = arith.constant 1.000000e+00 : f32
    %11 = vector.broadcast %cst_7 : f32 to vector<16x64xf32>
    %12 = arith.addf %11, %10 : vector<16x64xf32>
    %13 = arith.mulf %7, %12 : vector<16x64xf32>
    %c0_8 = arith.constant 0 : index
    %c0_9 = arith.constant 0 : index
    %14 = vector.load %arg4[%c0_8, %c0_9] : memref<64x32xf32, #tpu.memory_space<vmem>>, vector<64x32xf32>
    %cst_10 = arith.constant dense<0.000000e+00> : vector<16x32xf32>
    %15 = tpu.matmul %13, %14, %cst_10 {dimension_numbers = #tpu.dot_dimension_numbers<[1], [0], [0], [1], [0, 0, 1, 1], [], []>} : vector<16x64xf32>, vector<64x32xf32>, vector<16x32xf32> -> vector<16x32xf32>
    %c0_11 = arith.constant 0 : index
    %c0_12 = arith.constant 0 : index
    %16 = vector.load %arg5[%c0_11, %c0_12] : memref<1x32xf32, #tpu.memory_space<vmem>>, vector<1x32xf32>
    %17 = vector.broadcast %16 : vector<1x32xf32> to vector<16x32xf32>
    %18 = arith.addf %15, %17 : vector<16x32xf32>
    %c0_13 = arith.constant 0 : index
    %c0_14 = arith.constant 0 : index
    %19 = vector.load %arg6[%c0_13, %c0_14] : memref<16x32xf32, #tpu.memory_space<vmem>>, vector<16x32xf32>
    tpu.vector_store %arg6[%c0_13, %c0_14], %18 {strides = array<i32>} : memref<16x32xf32, #tpu.memory_space<vmem>>, vector<16x32xf32>,
    return
  }
  func.func @transform_0(%arg0: i32) -> (i32, i32) {
    %c0_i32 = arith.constant 0 : i32
    %c0_i32_0 = arith.constant 0 : i32
    return %arg0, %c0_i32 : i32, i32
  }
  func.func @transform_1(%arg0: i32) -> (i32, i32) {
    %c0_i32 = arith.constant 0 : i32
    %c0_i32_0 = arith.constant 0 : i32
    %c0_i32_1 = arith.constant 0 : i32
    return %c0_i32, %c0_i32_0 : i32, i32
  }
  func.func @transform_2(%arg0: i32) -> (i32, i32) {
    %c0_i32 = arith.constant 0 : i32
    %c0_i32_0 = arith.constant 0 : i32
    %c0_i32_1 = arith.constant 0 : i32
    return %c0_i32, %c0_i32_0 : i32, i32
  }
  func.func @transform_3(%arg0: i32) -> (i32, i32) {
    %c0_i32 = arith.constant 0 : i32
    %c0_i32_0 = arith.constant 0 : i32
    %c0_i32_1 = arith.constant 0 : i32
    return %c0_i32, %c0_i32_0 : i32, i32
  }
  func.func @transform_4(%arg0: i32) -> (i32, i32) {
    %c0_i32 = arith.constant 0 : i32
    %c0_i32_0 = arith.constant 0 : i32
    %c0_i32_1 = arith.constant 0 : i32
    return %c0_i32, %c0_i32_0 : i32, i32
  }
  func.func @transform_5(%arg0: i32) -> (i32, i32) {
    %c0_i32 = arith.constant 0 : i32
    %c0_i32_0 = arith.constant 0 : i32
    return %arg0, %c0_i32 : i32, i32
  }
}

</mosaic_0001>

<llo_original>
// kernel: tpu_custom_call.1
$region0: #{tpu_custom_call.1}
  #allocation0 [shape = 'u32[]', space=smem, size = 0x4, offset = 0x4, fixed_abs, tag = 'smem constant byte address 0x4 - core index']
  #allocation1 [shape = 'u32[144,128]{1,0:T(1,128)}', space=vmem, size = 0x12000, scoped, tag = 'internal scratch']
  %s0 = inlined_call_operand.vmem [shape: f32[16,32], index: 0, kind: input, shape index: {}]
  %s1 = inlined_call_operand.vmem [shape: f32[32,64], index: 1, kind: input, shape index: {}]
  %s2 = inlined_call_operand.vmem [shape: f32[1,64], index: 2, kind: input, shape index: {}]
  %s3 = inlined_call_operand.vmem [shape: f32[64,32], index: 3, kind: input, shape index: {}]
  %s4 = inlined_call_operand.vmem [shape: f32[1,32], index: 4, kind: input, shape index: {}]
  %s5 = inlined_call_operand.hbm [shape: f32[16,32], index: 5, kind: output, shape index: {}]
  %s6 = sld [smem:[#allocation0]]
  $region30: #{tpu_custom_call.1} parent=0
    _
  %s8 = ssub.s32 1, %s6
  %s9 = scalar_select 0, %s8, %s6
  $region1: #{tpu_custom_call.1} parent=0
    #allocation2 [shape = 'u8[8192]{0}', space=vmem, size = 0x2000, scoped, tag = 'output window, operand 0, single buffered']
    #allocation3 [shape = 's32[1]{0}', space=sflag, size = 0x4, scoped, tag = 'scoped memory for tpu_custom_call.1']
    %10 = vsyncpa [#allocation3], 0
    // Predicated region
    $region2: #{tpu_custom_call.1} parent=1 // pred_check
      _
    $region3: #{tpu_custom_call.1} parent=1 // pred_check_branch
      %12 = sbr.rel (0) target = $region5
    $region4: #{tpu_custom_call.1} parent=1 // pred_region
      _
    $region5: #{tpu_custom_call.1} parent=1 // pred_fallthru
      _
    // Predicated region
    $region6: #{tpu_custom_call.1} parent=1 // pred_check
      _
    $region7: #{tpu_custom_call.1} parent=1 // pred_check_branch
      %14 = sbr.rel (0) target = $region9
    $region8: #{tpu_custom_call.1} parent=1 // pred_region
      _
    $region9: #{tpu_custom_call.1} parent=1 // pred_fallthru
      _
    // Predicated region
    $region10: #{tpu_custom_call.1} parent=1 // pred_check
      _
    $region11: #{tpu_custom_call.1} parent=1 // pred_check_branch
      %16 = sbr.rel (0) target = $region13
    $region12: #{tpu_custom_call.1} parent=1 // pred_region
      _
    $region13: #{tpu_custom_call.1} parent=1 // pred_fallthru
      _
    // Predicated region
    $region14: #{tpu_custom_call.1} parent=1 // pred_check
      _
    $region15: #{tpu_custom_call.1} parent=1 // pred_check_branch
      %18 = sbr.rel (0) target = $region17
    $region16: #{tpu_custom_call.1} parent=1 // pred_region
      _
    $region17: #{tpu_custom_call.1} parent=1 // pred_fallthru
      _
    // Predicated region
    $region18: #{tpu_custom_call.1} parent=1 // pred_check
      _
    $region19: #{tpu_custom_call.1} parent=1 // pred_check_branch
      %20 = sbr.rel (0) target = $region21
    $region20: #{tpu_custom_call.1} parent=1 // pred_region
      _
    $region21: #{tpu_custom_call.1} parent=1 // pred_fallthru
      _
    %v21 = vld [vmem:[%s0] sm:$0xff]
    %v22 = vld [vmem:[%s0 + $0x8] sm:$0xff]
    %v23 = vld [vmem:[%s1] sm:$0xff]
    %v24 = vld [vmem:[%s1 + $0x8] sm:$0xff]
    %v25 = vld [vmem:[%s1 + $0x10] sm:$0xff]
    %v26 = vld [vmem:[%s1 + $0x18] sm:$0xff]
    %v27 = vld [vmem:[%s2] sm:$0x1]
    %v29 = vlaneseq
    %v30 = vshrl.u32 %v29, 7
    %v31 = vsub.s32 0, %v30
    %v32 = vrot.slane %v27, %v31
    %vm34 = vcmask 261120
    %v36 = vsel %vm34, %v21, 0
    %v39 = vsel %vm34, %v22, 0
    %41 = vmatprep.subr.mxu0 0.0
    %42 = vmatpush1.msra.mxu0 %v23
    %43 = vmatprep.subr.mxu0 0.0
    %44 = vmatpush1.msra.mxu0 %v24
    %45 = vmatprep.subr.mxu0 0.0
    %46 = vmatpush1.msra.mxu0 %v25
    %47 = vmatprep.subr.mxu0 0.0
    %48 = vmatpush1.msra.mxu0 %v26
    %49 = vmatprep.subr.mxu0 0.0
    %50 = vmatpush1.msra.mxu0 0.0
    %51 = vmatprep.subr.mxu0 0.0
    %52 = vmatpush1.msra.mxu0 0.0
    %53 = vmatprep.subr.mxu0 0.0
    %54 = vmatpush1.msra.mxu0 0.0
    %55 = vmatprep.subr.mxu0 0.0
    %56 = vmatpush1.msra.mxu0 0.0
    %57 = vmatprep.subr.mxu0 0.0
    %58 = vmatpush1.msra.mxu0 0.0
    %59 = vmatprep.subr.mxu0 0.0
    %60 = vmatpush1.msra.mxu0 0.0
    %61 = vmatprep.subr.mxu0 0.0
    %62 = vmatpush1.msra.mxu0 0.0
    %63 = vmatprep.subr.mxu0 0.0
    %64 = vmatpush1.msra.mxu0 0.0
    %65 = vmatprep.subr.mxu0 0.0
    %66 = vmatpush1.msra.mxu0 0.0
    %67 = vmatprep.subr.mxu0 0.0
    %68 = vmatpush1.msra.mxu0 0.0
    %69 = vmatprep.subr.mxu0 0.0
    %70 = vmatpush1.msra.mxu0 0.0
    %71 = vmatprep.subr.mxu0 0.0
    %72 = vmatpush1.msra.mxu0 0.0
    %73 = vmatprep.subr.mxu0 0.0
    %74 = vmatpush1.msra.mxu0 0.0
    %75 = vmatprep.subr.mxu0 0.0
    %76 = vmatpush1.msra.mxu0 0.0
    %77 = vmatprep.subr.mxu0 0.0
    %78 = vmatpush1.msra.mxu0 0.0
    %79 = vmatprep.subr.mxu0 0.0
    %80 = vmatpush1.msra.mxu0 0.0
    %81 = vmatprep.subr.mxu0 0.0
    %82 = vmatpush1.msra.mxu0 0.0
    %83 = vmatprep.subr.mxu0 0.0
    %84 = vmatpush1.msra.mxu0 0.0
    %85 = vmatprep.subr.mxu0 0.0
    %86 = vmatpush1.msra.mxu0 0.0
    %87 = vmatprep.subr.mxu0 0.0
    %88 = vmatpush1.msra.mxu0 0.0
    %89 = vmatprep.subr.mxu0 0.0
    %90 = vmatpush1.msra.mxu0 0.0
    %91 = vmatprep.subr.mxu0 0.0
    %92 = vmatpush1.msra.mxu0 0.0
    %93 = vmatprep.subr.mxu0 0.0
    %94 = vmatpush1.msra.mxu0 0.0
    %95 = vmatprep.subr.mxu0 0.0
    %96 = vmatpush1.msra.mxu0 0.0
    %97 = vmatprep.subr.mxu0 0.0
    %98 = vmatpush1.msra.mxu0 0.0
    %99 = vmatprep.subr.mxu0 0.0
    %100 = vmatpush1.msra.mxu0 0.0
    %101 = vmatprep.subr.mxu0 0.0
    %102 = vmatpush1.msra.mxu0 0.0
    %103 = vmatprep.subr.mxu0 0.0
    %104 = vmatpush1.msra.mxu0 0.0
    %105 = vmatprep.mubr.f32.mxu0 0.0
    %106 = vmatmul.mubr.f32.gmra.mrb[0].mxu0 %v36
    %v107 = vpop.f32.mrb[0].mxu0
    %v108 = vadd.f32 %v32, %v107
    %v109 = vpop.f32.mrb[0].mxu0
    %110 = vmatprep.mubr.f32.mxu0 0.0
    %111 = vmatmul.mubr.f32.gmra.mrb[0].mxu0 %v39
    %v112 = vpop.f32.mrb[0].mxu0
    %v113 = vadd.f32 %v32, %v112
    %v114 = vpop.f32.mrb[0].mxu0
    %115 = vdwg.mxu0
    %v116 = vmul.f32 %v108, 0.5
    %v117 = vmul.f32 %v113, 0.5
    %v118 = vmul.f32 %v108, 0.70710677
    %v119 = vmul.f32 %v113, 0.70710677
    %v120 = verf.f32.pop %v118
    %v121 = verf.f32.pop %v119
    %v122 = vadd.f32 %v120, 1.0
    %v123 = vadd.f32 %v121, 1.0
    %v124 = vmul.f32 %v116, %v122
    %v125 = vmul.f32 %v117, %v123
    %v126 = vld [vmem:[%s3] sm:$0xff]
    %v127 = vld [vmem:[%s3 + $0x8] sm:$0xff]
    %v128 = vld [vmem:[%s3 + $0x10] sm:$0xff]
    %v129 = vld [vmem:[%s3 + $0x18] sm:$0xff]
    %v130 = vld [vmem:[%s3 + $0x20] sm:$0xff]
    %v131 = vld [vmem:[%s3 + $0x28] sm:$0xff]
    %v132 = vld [vmem:[%s3 + $0x30] sm:$0xff]
    %v133 = vld [vmem:[%s3 + $0x38] sm:$0xff]
    %v134 = vld [vmem:[%s4] sm:$0x1]
    %v136 = vlaneseq
    %v137 = vshrl.u32 %v136, 7
    %v138 = vsub.s32 0, %v137
    %v139 = vrot.slane %v134, %v138
    %vm141 = vcmask 523264
    %v143 = vsel %vm141, %v124, 0
    %v146 = vsel %vm141, %v125, 0
    %148 = vmatprep.subr.mxu0 0.0
    %149 = vmatpush1.msra.mxu0 %v126
    %150 = vmatprep.subr.mxu0 0.0
    %151 = vmatpush1.msra.mxu0 %v127
    %152 = vmatprep.subr.mxu0 0.0
    %153 = vmatpush1.msra.mxu0 %v128
    %154 = vmatprep.subr.mxu0 0.0
    %155 = vmatpush1.msra.mxu0 %v129
    %156 = vmatprep.subr.mxu0 0.0
    %157 = vmatpush1.msra.mxu0 %v130
    %158 = vmatprep.subr.mxu0 0.0
    %159 = vmatpush1.msra.mxu0 %v131
    %160 = vmatprep.subr.mxu0 0.0
    %161 = vmatpush1.msra.mxu0 %v132
    %162 = vmatprep.subr.mxu0 0.0
    %163 = vmatpush1.msra.mxu0 %v133
    %164 = vmatprep.subr.mxu0 0.0
    %165 = vmatpush1.msra.mxu0 0.0
    %166 = vmatprep.subr.mxu0 0.0
    %167 = vmatpush1.msra.mxu0 0.0
    %168 = vmatprep.subr.mxu0 0.0
    %169 = vmatpush1.msra.mxu0 0.0
    %170 = vmatprep.subr.mxu0 0.0
    %171 = vmatpush1.msra.mxu0 0.0
    %172 = vmatprep.subr.mxu0 0.0
    %173 = vmatpush1.msra.mxu0 0.0
    %174 = vmatprep.subr.mxu0 0.0
    %175 = vmatpush1.msra.mxu0 0.0
    %176 = vmatprep.subr.mxu0 0.0
    %177 = vmatpush1.msra.mxu0 0.0
    %178 = vmatprep.subr.mxu0 0.0
    %179 = vmatpush1.msra.mxu0 0.0
    %180 = vmatprep.subr.mxu0 0.0
    %181 = vmatpush1.msra.mxu0 0.0
    %182 = vmatprep.subr.mxu0 0.0
    %183 = vmatpush1.msra.mxu0 0.0
    %184 = vmatprep.subr.mxu0 0.0
    %185 = vmatpush1.msra.mxu0 0.0
    %186 = vmatprep.subr.mxu0 0.0
    %187 = vmatpush1.msra.mxu0 0.0
    %188 = vmatprep.subr.mxu0 0.0
    %189 = vmatpush1.msra.mxu0 0.0
    %190 = vmatprep.subr.mxu0 0.0
    %191 = vmatpush1.msra.mxu0 0.0
    %192 = vmatprep.subr.mxu0 0.0
    %193 = vmatpush1.msra.mxu0 0.0
    %194 = vmatprep.subr.mxu0 0.0
    %195 = vmatpush1.msra.mxu0 0.0
    %196 = vmatprep.subr.mxu0 0.0
    %197 = vmatpush1.msra.mxu0 0.0
    %198 = vmatprep.subr.mxu0 0.0
    %199 = vmatpush1.msra.mxu0 0.0
    %200 = vmatprep.subr.mxu0 0.0
    %201 = vmatpush1.msra.mxu0 0.0
    %202 = vmatprep.subr.mxu0 0.0
    %203 = vmatpush1.msra.mxu0 0.0
    %204 = vmatprep.subr.mxu0 0.0
    %205 = vmatpush1.msra.mxu0 0.0
    %206 = vmatprep.subr.mxu0 0.0
    %207 = vmatpush1.msra.mxu0 0.0
    %208 = vmatprep.subr.mxu0 0.0
    %209 = vmatpush1.msra.mxu0 0.0
    %210 = vmatprep.subr.mxu0 0.0
    %211 = vmatpush1.msra.mxu0 0.0
    %212 = vmatprep.mubr.f32.mxu0 0.0
    %213 = vmatmul.mubr.f32.gmra.mrb[0].mxu0 %v143
    %v214 = vpop.f32.mrb[0].mxu0
    %v215 = vadd.f32 %v139, %v214
    %v216 = vpop.f32.mrb[0].mxu0
    %217 = vmatprep.mubr.f32.mxu0 0.0
    %218 = vmatmul.mubr.f32.gmra.mrb[0].mxu0 %v146
    %v219 = vpop.f32.mrb[0].mxu0
    %v220 = vadd.f32 %v139, %v219
    %v221 = vpop.f32.mrb[0].mxu0
    %222 = vdwg.mxu0
    %223 = vst.msk [vmem:[#allocation2] sm:$0xff] %vm34, %v215
    %224 = vst.msk [vmem:[#allocation2 + $0x8] sm:$0xff] %vm34, %v220
    // Predicated region
    $region22: #{tpu_custom_call.1} parent=1 // pred_check
      _
    $region23: #{tpu_custom_call.1} parent=1 // pred_check_branch
      %226 = sbr.rel (0) target = $region25
    $region24: #{tpu_custom_call.1} parent=1 // pred_region
      %s228 = ssub.s32 256, 256
      %229 = vsyncadd [#allocation3], %s228
      %s230 = sshll.u32 [#allocation2], 4
      %s231 = int_to_ptr.vmem [resolvable:$true] %s230
      %236 = dma.vmem_to_hbm [thread:$0]  %s231, 256, %s5, [#allocation3], 128, 128, 8
    $region25: #{tpu_custom_call.1} parent=1 // pred_fallthru
      _
    // Predicated region
    $region26: #{tpu_custom_call.1} parent=1 // pred_check
      _
    $region27: #{tpu_custom_call.1} parent=1 // pred_check_branch
      %238 = sbr.rel (0) target = $region29
    $region28: #{tpu_custom_call.1} parent=1 // pred_region
      %239 = dma.done [#allocation3], 256
    $region29: #{tpu_custom_call.1} parent=1 // pred_fallthru
      _
    %240 = vsyncpa [#allocation3], 1

</llo_original>
